<compile_context>
chip_gen: v7x
topology: tpu7x:2x2x1
jax: 0.10.0
libtpu: 0.0.40
codegen_flags: <defaults>
</compile_context>

<pallas_src>
import re

import jax
import jax.numpy as jnp
from jax.experimental import pallas as pl
from jax.experimental.pallas import tpu as pltpu

_SQRT_2_OVER_PI = 0.7978845608028654
_LANE = 128


def _gelu_kernel(x_ref, o_ref):
    x = x_ref[...].astype(jnp.float32)
    c = jnp.float32(_SQRT_2_OVER_PI)
    inner = c * (x + jnp.float32(0.044715) * x * x * x)
    y = jnp.float32(0.5) * x * (jnp.float32(1.0) + jnp.tanh(inner))
    o_ref[...] = y.astype(o_ref.dtype)


def _gelu_jnp(x):
    """Plain-JAX GELU(tanh) for tiny ragged tails; same f32 math as the kernel."""
    x32 = x.astype(jnp.float32)
    c = jnp.float32(_SQRT_2_OVER_PI)
    inner = c * (x32 + jnp.float32(0.044715) * x32 * x32 * x32)
    y = jnp.float32(0.5) * x32 * (jnp.float32(1.0) + jnp.tanh(inner))
    return y.astype(x.dtype)


def _tpu_generation():
    try:
        kind = jax.devices()[0].device_kind.lower()
    except Exception:
        return 0
    m = re.search(r"v\s*(\d+)", kind) or re.search(r"(\d+)", kind)
    return int(m.group(1)) if m else 0


def _block_config(dtype):
    itemsize = jnp.dtype(dtype).itemsize
    sublane = {4: 8, 2: 16, 1: 32}.get(itemsize, 8)
    gen = _tpu_generation()
    if gen >= 7:
        # ~6 MiB blocks -> ~24 MiB of double-buffered in+out; raise the scoped
        # VMEM limit explicitly but stay well under the 64 MiB physical VMEM.
        return 6 * 1024 * 1024, 48 * 1024 * 1024, sublane, itemsize
    if gen == 6:
        # ~4 MiB blocks -> ~16 MiB of buffers, inside the 32 MiB default limit.
        return 4 * 1024 * 1024, None, sublane, itemsize
    # v5e and older / unknown: 2 MiB blocks fit the 16 MiB default scoped VMEM.
    return 2 * 1024 * 1024, None, sublane, itemsize


def _choose_block_rows(rows, width, itemsize, target_block_bytes, sublane):
    """Pick a sublane-aligned row block so the 1-D grid has >= 2 (even) steps."""
    if rows <= 2 * sublane:
        return rows  # too small to split; full-extent block is always legal
    target_rows = max(
        sublane, (target_block_bytes // (width * itemsize)) // sublane * sublane
    )
    steps = max(2, -(-rows // target_rows))   # >= 2 so both v7x TCs get work
    if steps < 8 and steps % 2:
        steps += 1                            # even short grids: no tail imbalance
    block_rows = -(-rows // steps)
    block_rows = -(-block_rows // sublane) * sublane
    return min(block_rows, rows)


def _run_aligned(flat, dtype):
    """Run the kernel on a 1-D array whose length is a multiple of 128."""
    n_eff = flat.shape[0]
    # Widest lane-dense slab width that evenly divides the element count.
    width = _LANE
    for cand in (4096, 2048, 1024, 512, 256):
        if n_eff % cand == 0:
            width = cand
            break
    rows = n_eff // width
    target_block_bytes, vmem_limit, sublane, itemsize = _block_config(dtype)
    block_rows = _choose_block_rows(rows, width, itemsize, target_block_bytes, sublane)
    grid = (pl.cdiv(rows, block_rows),)

    slab = flat.reshape(rows, width)
    out = pl.pallas_call(
        _gelu_kernel,
        out_shape=jax.ShapeDtypeStruct((rows, width), dtype),
        grid_spec=pltpu.PrefetchScalarGridSpec(
            num_scalar_prefetch=0,
            grid=grid,
            in_specs=[pl.BlockSpec((block_rows, width), lambda i: (i, 0))],
            out_specs=pl.BlockSpec((block_rows, width), lambda i: (i, 0)),
        ),
        compiler_params=pltpu.CompilerParams(
            dimension_semantics=("parallel",),
            vmem_limit_bytes=vmem_limit,
        ),
        cost_estimate=pl.CostEstimate(
            flops=10 * n_eff,
            transcendentals=n_eff,
            bytes_accessed=2 * n_eff * itemsize,
        ),
        # TODO(synk): sweep pipeline_mode=pl.Buffered(3) on v7x once the block
        # budget is locked in (review item; default 2-deep buffering kept).
    )(slab)
    return out.reshape(-1)


def gelu_pallas(x):
    orig_shape = x.shape
    orig_dtype = x.dtype
    n = int(x.size)

    flat = jnp.ravel(x)

    if n % _LANE == 0:
        return _run_aligned(flat, orig_dtype).reshape(orig_shape)

    # Ragged fallback: kernel on the 128-aligned prefix, tiny tail in plain jnp
    # (no full-tensor pad + slice round trips).
    n_main = (n // _LANE) * _LANE
    if n_main == 0:
        # Fewer than 128 elements total: not worth a kernel launch.
        return _gelu_jnp(flat).reshape(orig_shape)
    main = _run_aligned(flat[:n_main], orig_dtype)
    tail = _gelu_jnp(flat[n_main:])
    return jnp.concatenate([main, tail]).reshape(orig_shape)


def gelu_reference(x):
    c = jnp.float32(_SQRT_2_OVER_PI)
    return 0.5 * x * (1.0 + jnp.tanh(c * (x + 0.044715 * x ** 3)))


if __name__ == "__main__":
    # Primary test: NCHW tensor matching the module's typical use.
    x = jax.random.normal(jax.random.PRNGKey(0), (2, 4, 16, 16), dtype=jnp.float32)
    y = gelu_pallas(x)
    jax.block_until_ready(y)
    assert y.shape == x.shape and y.dtype == x.dtype
    assert jnp.allclose(y, gelu_reference(x), atol=1e-5, rtol=1e-5)

    # Multi-block path (>= 2 parallel grid steps).
    x2 = jax.random.normal(jax.random.PRNGKey(1), (4, 32, 64, 64), dtype=jnp.float32)
    y2 = gelu_pallas(x2)
    jax.block_until_ready(y2)
    assert jnp.allclose(y2, gelu_reference(x2), atol=1e-5, rtol=1e-5)

    # Ragged element count (exercises the aligned-prefix + jnp-tail path).
    x3 = jax.random.normal(jax.random.PRNGKey(2), (2, 3, 25), dtype=jnp.float32)
    y3 = gelu_pallas(x3)
    jax.block_until_ready(y3)
    assert y3.shape == x3.shape
    assert jnp.allclose(y3, gelu_reference(x3), atol=1e-5, rtol=1e-5)

    print("KERNEL_OK")
</pallas_src>

<mosaic_0001>
module attributes {stable_mosaic.version = 11 : i64} {
  func.func @_gelu_kernel(%arg0: i32, %arg1: memref<1x2048xf32, #tpu.memory_space<vmem>>, %arg2: memref<1x2048xf32, #tpu.memory_space<vmem>>) attributes {dimension_semantics = [#tpu.dimension_semantics<parallel>], iteration_bounds = array<i64: 1>, scalar_prefetch = 0 : i64, scratch_operands = 0 : i64, tpu.core_type = #tpu.core_type<tc>, window_params = [{transform_indices = @transform_0, window_bounds = array<i64: 1, 2048>}, {transform_indices = @transform_1, window_bounds = array<i64: 1, 2048>}]} {
    %c0 = arith.constant 0 : index
    %c0_0 = arith.constant 0 : index
    %0 = vector.load %arg1[%c0, %c0_0] : memref<1x2048xf32, #tpu.memory_space<vmem>>, vector<1x2048xf32>
    %cst = arith.constant 4.471500e-02 : f32
    %1 = vector.broadcast %cst : f32 to vector<1x2048xf32>
    %2 = arith.mulf %1, %0 : vector<1x2048xf32>
    %3 = arith.mulf %2, %0 : vector<1x2048xf32>
    %4 = arith.mulf %3, %0 : vector<1x2048xf32>
    %5 = arith.addf %0, %4 : vector<1x2048xf32>
    %cst_1 = arith.constant 0.797884583 : f32
    %6 = vector.broadcast %cst_1 : f32 to vector<1x2048xf32>
    %7 = arith.mulf %6, %5 : vector<1x2048xf32>
    %cst_2 = arith.constant 5.000000e-01 : f32
    %8 = vector.broadcast %cst_2 : f32 to vector<1x2048xf32>
    %9 = arith.mulf %8, %0 : vector<1x2048xf32>
    %10 = math.tanh %7 : vector<1x2048xf32>
    %cst_3 = arith.constant 1.000000e+00 : f32
    %11 = vector.broadcast %cst_3 : f32 to vector<1x2048xf32>
    %12 = arith.addf %11, %10 : vector<1x2048xf32>
    %13 = arith.mulf %9, %12 : vector<1x2048xf32>
    %c0_4 = arith.constant 0 : index
    %c0_5 = arith.constant 0 : index
    %14 = vector.load %arg2[%c0_4, %c0_5] : memref<1x2048xf32, #tpu.memory_space<vmem>>, vector<1x2048xf32>
    tpu.vector_store %arg2[%c0_4, %c0_5], %13 {strides = array<i32>} : memref<1x2048xf32, #tpu.memory_space<vmem>>, vector<1x2048xf32>,
    return
  }
  func.func @transform_0(%arg0: i32) -> (i32, i32) {
    %c0_i32 = arith.constant 0 : i32
    %c0_i32_0 = arith.constant 0 : i32
    return %arg0, %c0_i32 : i32, i32
  }
  func.func @transform_1(%arg0: i32) -> (i32, i32) {
    %c0_i32 = arith.constant 0 : i32
    %c0_i32_0 = arith.constant 0 : i32
    return %arg0, %c0_i32 : i32, i32
  }
}

</mosaic_0001>

<llo_original>
// kernel: tpu_custom_call.1
$region0: #{tpu_custom_call.1}
  #allocation0 [shape = 'u32[]', space=smem, size = 0x4, offset = 0x4, fixed_abs, tag = 'smem constant byte address 0x4 - core index']
  #allocation1 [shape = 'u32[144,128]{1,0:T(1,128)}', space=vmem, size = 0x12000, scoped, tag = 'internal scratch']
  %s0 = inlined_call_operand.hbm [shape: f32[1,2048], index: 0, kind: input, shape index: {}]
  %s1 = inlined_call_operand.hbm [shape: f32[1,2048], index: 1, kind: output, shape index: {}]
  %s2 = sld [smem:[#allocation0]]
  $region18: #{tpu_custom_call.1} parent=0
    _
  %s4 = ssub.s32 1, %s2
  %s5 = scalar_select 0, %s4, %s2
  $region1: #{tpu_custom_call.1} parent=0
    #allocation2 [shape = 'u8[8192]{0}', space=vmem, size = 0x2000, scoped, tag = 'input window, operand 0, single buffered']
    #allocation3 [shape = 's32[1]{0}', space=sflag, size = 0x4, scoped, tag = 'scoped memory for tpu_custom_call.1']
    #allocation4 [shape = 's32[1]{0}', space=sflag, size = 0x4, scoped, tag = 'scoped memory for tpu_custom_call.1']
    #allocation5 [shape = 'u8[8192]{0}', space=vmem, size = 0x2000, scoped, tag = 'output window, operand 0, single buffered']
    %6 = vsyncpa [#allocation3], 0
    %7 = vsyncpa [#allocation4], 0
    // Predicated region
    $region2: #{tpu_custom_call.1} parent=1 // pred_check
      _
    $region3: #{tpu_custom_call.1} parent=1 // pred_check_branch
      %9 = sbr.rel (0) target = $region5
    $region4: #{tpu_custom_call.1} parent=1 // pred_region
      %s11 = ssub.s32 256, 256
      %12 = vsyncadd [#allocation3], %s11
      %s14 = sshll.u32 [#allocation2], 4
      %s15 = int_to_ptr.vmem [resolvable:$true] %s14
      %17 = dma.hbm_to_vmem [thread:$0]  %s0, 256, %s15, [#allocation3]
    $region5: #{tpu_custom_call.1} parent=1 // pred_fallthru
      _
    // Predicated region
    $region6: #{tpu_custom_call.1} parent=1 // pred_check
      _
    $region7: #{tpu_custom_call.1} parent=1 // pred_check_branch
      %19 = sbr.rel (0) target = $region9
    $region8: #{tpu_custom_call.1} parent=1 // pred_region
      %20 = dma.done [#allocation3], 256
    $region9: #{tpu_custom_call.1} parent=1 // pred_fallthru
      _
    %v21 = vld [vmem:[#allocation2] sm:$0xff]
    %v22 = vld [vmem:[#allocation2 + $0x8] sm:$0xff]
    %v23 = vmul.f32 %v21, 0.044715
    %v24 = vmul.f32 %v22, 0.044715
    %v25 = vmul.f32 %v23, %v21
    %v26 = vmul.f32 %v24, %v22
    %v27 = vmul.f32 %v25, %v21
    %v28 = vmul.f32 %v26, %v22
    %v29 = vadd.f32 %v21, %v27
    %v30 = vadd.f32 %v22, %v28
    %v31 = vmul.f32 %v29, 0.7978846
    %v32 = vmul.f32 %v30, 0.7978846
    %v33 = vmul.f32 %v21, 0.5
    %v34 = vmul.f32 %v22, 0.5
    %v35 = vtanh.pop %v31
    %v36 = vtanh.pop %v32
    %v37 = vadd.f32 %v35, 1.0
    %v38 = vadd.f32 %v36, 1.0
    %v39 = vmul.f32 %v33, %v37
    %v40 = vmul.f32 %v34, %v38
    %41 = vst [vmem:[#allocation5] sm:$0xff] %v39
    %42 = vst [vmem:[#allocation5 + $0x8] sm:$0xff] %v40
    // Predicated region
    $region10: #{tpu_custom_call.1} parent=1 // pred_check
      _
    $region11: #{tpu_custom_call.1} parent=1 // pred_check_branch
      %44 = sbr.rel (0) target = $region13
    $region12: #{tpu_custom_call.1} parent=1 // pred_region
      %s46 = ssub.s32 256, 256
      %47 = vsyncadd [#allocation4], %s46
      %s49 = sshll.u32 [#allocation5], 4
      %s50 = int_to_ptr.vmem [resolvable:$true] %s49
      %52 = dma.vmem_to_hbm [thread:$0]  %s50, 256, %s1, [#allocation4]
    $region13: #{tpu_custom_call.1} parent=1 // pred_fallthru
      _
    // Predicated region
    $region14: #{tpu_custom_call.1} parent=1 // pred_check
      _
    $region15: #{tpu_custom_call.1} parent=1 // pred_check_branch
      %54 = sbr.rel (0) target = $region17
    $region16: #{tpu_custom_call.1} parent=1 // pred_region
      %55 = dma.done [#allocation4], 256
    $region17: #{tpu_custom_call.1} parent=1 // pred_fallthru
      _
    %56 = vsyncpa [#allocation3], 1
    %57 = vsyncpa [#allocation4], 1

</llo_original>
